<compile_context>
chip_gen: v7x
topology: tpu7x:2x2x1
jax: 0.10.0
libtpu: 0.0.40
codegen_flags: <defaults>
</compile_context>

<pallas_src>
import functools

import jax
import jax.numpy as jnp
from jax.experimental import pallas as pl
from jax.experimental.pallas import tpu as pltpu

_EPS = 1e-5
_BLOCK_BUDGET_BYTES = 2 * 1024 * 1024    # ~2 MiB input block per grid step
_VMEM_LIMIT_BYTES = 32 * 1024 * 1024     # raise v5e's 16 MiB scoped default
_MAX_LANE_CHUNKS = 64                    # cap hw_tile at 64 * 128 lanes


def _pick_c_tile(C):
    """Channel tile: a divisor of C in multiples of 8, capped at 64."""
    if C % 8 == 0:
        for c in (64, 32, 16, 8):
            if C % c == 0:
                return c
    # Ragged channel count (rare for CNNs): one full-dim block.  Sublane-padded
    # vregs, but avoids an extra HBM pad copy of x and any block over-cover.
    return C


def _pick_hw_tile(HW, c_tile, itemsize):
    """Lane tile (multiple of 128 when possible) sized to ~_BLOCK_BUDGET."""
    if HW < 128:
        return HW, HW                       # single ragged chunk, full-dim block
    budget_chunks = max(1, _BLOCK_BUDGET_BYTES // (c_tile * 128 * itemsize))
    k = max(1, min(budget_chunks, HW // 128, _MAX_LANE_CHUNKS))
    return 128 * k, 128


def _for_each_chunk(n_chunks, acc_w, body, carry, unroll=4):
    """Run body(lane_offset, carry) -> carry over the 128-lane chunks of a tile."""
    if n_chunks <= 8:                       # small: fully static unroll
        for j in range(n_chunks):
            carry = body(j * acc_w, carry)
        return carry

    def fbody(j, c):
        return body(pl.multiple_of(j * acc_w, acc_w), c)

    return jax.lax.fori_loop(0, n_chunks, fbody, carry, unroll=unroll)


def _stats_kernel(x_ref, sum_ref, sq_ref, *, n_chunks, acc_w, hw_total, hw_tile):
    """Accumulate per-channel partial sum / sum-of-squares.

    x_ref:   (1, c_tile, hw_tile) input tile
    sum_ref: (1, c_tile, acc_w) f32 accumulator (resident across (N, HW) axes)
    sq_ref:  (1, c_tile, acc_w) f32 accumulator
    """
    n = pl.program_id(2)
    m = pl.program_id(3)

    @pl.when((n == 0) & (m == 0))
    def _():
        sum_ref[...] = jnp.zeros_like(sum_ref)
        sq_ref[...] = jnp.zeros_like(sq_ref)

    c_tile = x_ref.shape[1]
    needs_mask = (hw_total % hw_tile) != 0      # static
    if needs_mask:
        lane = jax.lax.broadcasted_iota(jnp.int32, (c_tile, acc_w), 1)
        valid = hw_total - m * hw_tile          # valid lanes in this tile

    def body(start, carry):
        s, q = carry
        # Per-chunk load straight from the ref: keeps live vregs low.
        xc = x_ref[0, :, pl.ds(start, acc_w)].astype(jnp.float32)
        if needs_mask:
            xc = jnp.where(lane < (valid - start), xc, 0.0)
        return s + xc, q + xc * xc

    unroll = 4 if c_tile <= 32 else 2
    s, q = _for_each_chunk(n_chunks, acc_w, body, (sum_ref[0], sq_ref[0]),
                           unroll=unroll)
    sum_ref[0] = s
    sq_ref[0] = q


def _norm_kernel(x_ref, scale_ref, shift_ref, out_ref, *, n_chunks, acc_w):
    """y = x * scale + shift, processed in lane-dense 128-wide chunks."""
    scale = scale_ref[...]                      # (c_tile, acc_w), lane-dense
    shift = shift_ref[...]

    def body(start, carry):
        sl = pl.ds(start, acc_w)
        xc = x_ref[0, :, sl].astype(jnp.float32)
        out_ref[0, :, sl] = (xc * scale + shift).astype(out_ref.dtype)
        return carry

    _for_each_chunk(n_chunks, acc_w, body, 0, unroll=4)


@functools.partial(jax.jit, static_argnames=())
def _dual_bn2d_impl(x, gamma, beta):
    N, C, H, W = x.shape
    HW = H * W
    x3 = x.reshape(N, C, HW)                    # free reshape; no transpose

    c_tile = _pick_c_tile(C)
    hw_tile, acc_w = _pick_hw_tile(HW, c_tile, x.dtype.itemsize)
    n_chunks = hw_tile // acc_w
    grid_c = pl.cdiv(C, c_tile)
    grid_hw = pl.cdiv(HW, hw_tile)

    # v7x megacore: with a single channel tile, split the batch into two
    # independent partial-accumulator groups so both TensorCores get pass-1
    # work.  No-op on v5e/v6e (single TensorCore).
    n_groups = 2 if (grid_c < 2 and N >= 2 and N % 2 == 0) else 1
    n_per_group = N // n_groups

    # ------------- pass 1: per-channel partial sums -------------
    psum, psq = pl.pallas_call(
        functools.partial(_stats_kernel, n_chunks=n_chunks, acc_w=acc_w,
                          hw_total=HW, hw_tile=hw_tile),
        out_shape=(
            jax.ShapeDtypeStruct((n_groups, C, acc_w), jnp.float32),
            jax.ShapeDtypeStruct((n_groups, C, acc_w), jnp.float32),
        ),
        grid=(n_groups, grid_c, n_per_group, grid_hw),
        in_specs=[
            pl.BlockSpec((1, c_tile, hw_tile),
                         lambda g, c, n, m: (g * n_per_group + n, c, m)),
        ],
        out_specs=(
            pl.BlockSpec((1, c_tile, acc_w), lambda g, c, n, m: (g, c, 0)),
            pl.BlockSpec((1, c_tile, acc_w), lambda g, c, n, m: (g, c, 0)),
        ),
        compiler_params=pltpu.CompilerParams(
            dimension_semantics=("parallel", "parallel", "arbitrary", "arbitrary"),
            vmem_limit_bytes=_VMEM_LIMIT_BYTES),
    )(x3)

    # ------------- finalize (tiny, plain JAX) -------------
    total = float(N * HW)
    mean = jnp.sum(psum, axis=(0, 2)) / total                 # (C,)
    ex2 = jnp.sum(psq, axis=(0, 2)) / total
    # Biased variance via E[x^2] - mean^2, clamped against cancellation.
    # TODO(synk): a shifted/compensated accumulation would be more robust when
    # |mean| >> std; fine for typical activation statistics.
    var = jnp.maximum(ex2 - mean * mean, 0.0)
    inv_std = jax.lax.rsqrt(var + _EPS)
    scale = gamma.astype(jnp.float32) * inv_std               # (C,)
    shift = beta.astype(jnp.float32) - mean * scale
    # Lane-dense copies so pass 2 needs no per-tile lane broadcast.
    scale2 = jnp.broadcast_to(scale[:, None], (C, acc_w))
    shift2 = jnp.broadcast_to(shift[:, None], (C, acc_w))

    # ------------- pass 2: normalize (elementwise, all-parallel) -------------
    extents = {"n": N, "c": grid_c, "m": grid_hw}
    order = sorted(("n", "c", "m"), key=lambda a: -extents[a])  # largest first

    def _axis_map(out_axes):
        def f(*gids):
            idx = dict(zip(order, gids))
            return tuple(idx[a] if isinstance(a, str) else a for a in out_axes)
        return f

    y3 = pl.pallas_call(
        functools.partial(_norm_kernel, n_chunks=n_chunks, acc_w=acc_w),
        out_shape=jax.ShapeDtypeStruct((N, C, HW), x.dtype),
        grid=tuple(extents[a] for a in order),
        in_specs=[
            pl.BlockSpec((1, c_tile, hw_tile), _axis_map(("n", "c", "m"))),
            pl.BlockSpec((c_tile, acc_w), _axis_map(("c", 0))),
            pl.BlockSpec((c_tile, acc_w), _axis_map(("c", 0))),
        ],
        out_specs=pl.BlockSpec((1, c_tile, hw_tile), _axis_map(("n", "c", "m"))),
        compiler_params=pltpu.CompilerParams(
            dimension_semantics=("parallel", "parallel", "parallel"),
            vmem_limit_bytes=_VMEM_LIMIT_BYTES),
    )(x3, scale2, shift2)

    return y3.reshape(N, C, H, W)


def dual_bn2d(x, params, flag=False):
    """x: (N, C, H, W). params: dict with gamma/beta for both BN branches."""
    if flag:
        gamma, beta = params["gamma_ssl"], params["beta_ssl"]
    else:
        gamma, beta = params["gamma"], params["beta"]
    return _dual_bn2d_impl(x, gamma, beta)


def init_dual_bn2d_params(num_channels, key):
    """Deterministic parameter init for both BN branches.

    (PyTorch default is weight=1, bias=0; deterministic random values keep the
    two branches distinguishable.)
    """
    k1, k2, k3, k4 = jax.random.split(key, 4)
    return {
        "gamma": 1.0 + 0.1 * jax.random.normal(k1, (num_channels,), jnp.float32),
        "beta": 0.1 * jax.random.normal(k2, (num_channels,), jnp.float32),
        "gamma_ssl": 1.0 + 0.1 * jax.random.normal(k3, (num_channels,), jnp.float32),
        "beta_ssl": 0.1 * jax.random.normal(k4, (num_channels,), jnp.float32),
    }


def _reference_bn(x, gamma, beta):
    # pure-JAX reference of training-mode BatchNorm2d
    mean = jnp.mean(x, axis=(0, 2, 3), keepdims=True)
    var = jnp.mean((x - mean) ** 2, axis=(0, 2, 3), keepdims=True)
    g = gamma.reshape(1, -1, 1, 1)
    b = beta.reshape(1, -1, 1, 1)
    return (x - mean) / jnp.sqrt(var + _EPS) * g + b


if __name__ == "__main__":
    key = jax.random.PRNGKey(0)
    kx, kp, kx2, kp2 = jax.random.split(key, 4)

    # Primary shape: C not a multiple of 8, HW a multiple of 128.
    N, C, H, W = 2, 4, 16, 16
    x = jax.random.normal(kx, (N, C, H, W), jnp.float32)
    params = init_dual_bn2d_params(C, kp)

    out_main = dual_bn2d(x, params, flag=False)   # self.bn branch
    out_ssl = dual_bn2d(x, params, flag=True)     # self.bn_ssl branch
    jax.block_until_ready(out_main)
    jax.block_until_ready(out_ssl)

    ref_main = _reference_bn(x, params["gamma"], params["beta"])
    ref_ssl = _reference_bn(x, params["gamma_ssl"], params["beta_ssl"])
    assert jnp.allclose(out_main, ref_main, atol=1e-4, rtol=1e-4)
    assert jnp.allclose(out_ssl, ref_ssl, atol=1e-4, rtol=1e-4)

    # Secondary shape: C multiple of 8, HW smaller than a full 128-lane tile
    # (exercises the ragged-lane / full-dim block path).
    N2, C2, H2, W2 = 2, 16, 8, 8
    x2 = jax.random.normal(kx2, (N2, C2, H2, W2), jnp.float32)
    params2 = init_dual_bn2d_params(C2, kp2)
    out2 = dual_bn2d(x2, params2, flag=True)
    jax.block_until_ready(out2)
    ref2 = _reference_bn(x2, params2["gamma_ssl"], params2["beta_ssl"])
    assert jnp.allclose(out2, ref2, atol=1e-4, rtol=1e-4)

    print("KERNEL_OK")
</pallas_src>

<mosaic_0001>
module attributes {stable_mosaic.version = 11 : i64} {
  func.func @_stats_kernel(%arg0: i32, %arg1: i32, %arg2: i32, %arg3: i32, %arg4: memref<1x4x256xf32, #tpu.memory_space<vmem>>, %arg5: memref<1x4x128xf32, #tpu.memory_space<vmem>>, %arg6: memref<1x4x128xf32, #tpu.memory_space<vmem>>) attributes {dimension_semantics = [#tpu.dimension_semantics<parallel>, #tpu.dimension_semantics<parallel>, #tpu.dimension_semantics<arbitrary>, #tpu.dimension_semantics<arbitrary>], iteration_bounds = array<i64: 2, 1, 1, 1>, scalar_prefetch = 0 : i64, scratch_operands = 0 : i64, tpu.core_type = #tpu.core_type<tc>, window_params = [{transform_indices = @transform_0, window_bounds = array<i64: 1, 4, 256>}, {transform_indices = @transform_1, window_bounds = array<i64: 1, 4, 128>}, {transform_indices = @transform_2, window_bounds = array<i64: 1, 4, 128>}]} {
    %c0_i32 = arith.constant 0 : i32
    %0 = arith.cmpi eq, %arg2, %c0_i32 : i32
    %c0_i32_0 = arith.constant 0 : i32
    %1 = arith.cmpi eq, %arg3, %c0_i32_0 : i32
    %2 = arith.andi %0, %1 : i1
    %3 = arith.extui %2 : i1 to i32
    %c0_i32_1 = arith.constant 0 : i32
    %4 = arith.cmpi ne, %3, %c0_i32_1 : i32
    scf.if %4 {
      %cst = arith.constant 0.000000e+00 : f32
      %25 = vector.broadcast %cst : f32 to vector<1x4x128xf32>
      %c0_18 = arith.constant 0 : index
      %c0_19 = arith.constant 0 : index
      %c0_20 = arith.constant 0 : index
      %26 = vector.load %arg5[%c0_18, %c0_19, %c0_20] : memref<1x4x128xf32, #tpu.memory_space<vmem>>, vector<1x4x128xf32>
      tpu.vector_store %arg5[%c0_18, %c0_19, %c0_20], %25 {strides = array<i32>} : memref<1x4x128xf32, #tpu.memory_space<vmem>>, vector<1x4x128xf32>,
      %cst_21 = arith.constant 0.000000e+00 : f32
      %27 = vector.broadcast %cst_21 : f32 to vector<1x4x128xf32>
      %c0_22 = arith.constant 0 : index
      %c0_23 = arith.constant 0 : index
      %c0_24 = arith.constant 0 : index
      %28 = vector.load %arg6[%c0_22, %c0_23, %c0_24] : memref<1x4x128xf32, #tpu.memory_space<vmem>>, vector<1x4x128xf32>
      tpu.vector_store %arg6[%c0_22, %c0_23, %c0_24], %27 {strides = array<i32>} : memref<1x4x128xf32, #tpu.memory_space<vmem>>, vector<1x4x128xf32>,
    } else {
    }
    %c0 = arith.constant 0 : index
    %c0_2 = arith.constant 0 : index
    %c0_3 = arith.constant 0 : index
    %5 = vector.load %arg5[%c0, %c0_2, %c0_3] : memref<1x4x128xf32, #tpu.memory_space<vmem>>, vector<1x4x128xf32>
    %6 = vector.shape_cast %5 : vector<1x4x128xf32> to vector<4x128xf32>
    %c0_4 = arith.constant 0 : index
    %c0_5 = arith.constant 0 : index
    %c0_6 = arith.constant 0 : index
    %7 = vector.load %arg6[%c0_4, %c0_5, %c0_6] : memref<1x4x128xf32, #tpu.memory_space<vmem>>, vector<1x4x128xf32>
    %8 = vector.shape_cast %7 : vector<1x4x128xf32> to vector<4x128xf32>
    %c0_7 = arith.constant 0 : index
    %c0_8 = arith.constant 0 : index
    %c0_9 = arith.constant 0 : index
    %9 = vector.load %arg4[%c0_7, %c0_8, %c0_9] : memref<1x4x256xf32, #tpu.memory_space<vmem>>, vector<1x4x128xf32>
    %10 = vector.shape_cast %9 : vector<1x4x128xf32> to vector<4x128xf32>
    %11 = arith.addf %6, %10 : vector<4x128xf32>
    %12 = arith.mulf %10, %10 : vector<4x128xf32>
    %13 = arith.addf %8, %12 : vector<4x128xf32>
    %c0_10 = arith.constant 0 : index
    %c0_11 = arith.constant 0 : index
    %c128 = arith.constant 128 : index
    %14 = vector.load %arg4[%c0_10, %c0_11, %c128] : memref<1x4x256xf32, #tpu.memory_space<vmem>>, vector<1x4x128xf32>
    %15 = vector.shape_cast %14 : vector<1x4x128xf32> to vector<4x128xf32>
    %16 = arith.addf %11, %15 : vector<4x128xf32>
    %17 = arith.mulf %15, %15 : vector<4x128xf32>
    %18 = arith.addf %13, %17 : vector<4x128xf32>
    %c0_12 = arith.constant 0 : index
    %c0_13 = arith.constant 0 : index
    %c0_14 = arith.constant 0 : index
    %19 = vector.load %arg5[%c0_12, %c0_13, %c0_14] : memref<1x4x128xf32, #tpu.memory_space<vmem>>, vector<1x4x128xf32>
    %20 = vector.shape_cast %19 : vector<1x4x128xf32> to vector<4x128xf32>
    %21 = vector.shape_cast %16 : vector<4x128xf32> to vector<1x4x128xf32>
    tpu.vector_store %arg5[%c0_12, %c0_13, %c0_14], %21 {strides = array<i32>} : memref<1x4x128xf32, #tpu.memory_space<vmem>>, vector<1x4x128xf32>,
    %c0_15 = arith.constant 0 : index
    %c0_16 = arith.constant 0 : index
    %c0_17 = arith.constant 0 : index
    %22 = vector.load %arg6[%c0_15, %c0_16, %c0_17] : memref<1x4x128xf32, #tpu.memory_space<vmem>>, vector<1x4x128xf32>
    %23 = vector.shape_cast %22 : vector<1x4x128xf32> to vector<4x128xf32>
    %24 = vector.shape_cast %18 : vector<4x128xf32> to vector<1x4x128xf32>
    tpu.vector_store %arg6[%c0_15, %c0_16, %c0_17], %24 {strides = array<i32>} : memref<1x4x128xf32, #tpu.memory_space<vmem>>, vector<1x4x128xf32>,
    return
  }
  func.func @transform_0(%arg0: i32, %arg1: i32, %arg2: i32, %arg3: i32) -> (i32, i32, i32) {
    %c1_i32 = arith.constant 1 : i32
    %0 = arith.muli %arg0, %c1_i32 : i32
    %1 = arith.addi %0, %arg2 : i32
    %c0_i32 = arith.constant 0 : i32
    return %1, %arg1, %arg3 : i32, i32, i32
  }
  func.func @transform_1(%arg0: i32, %arg1: i32, %arg2: i32, %arg3: i32) -> (i32, i32, i32) {
    %c0_i32 = arith.constant 0 : i32
    %c0_i32_0 = arith.constant 0 : i32
    return %arg0, %arg1, %c0_i32 : i32, i32, i32
  }
  func.func @transform_2(%arg0: i32, %arg1: i32, %arg2: i32, %arg3: i32) -> (i32, i32, i32) {
    %c0_i32 = arith.constant 0 : i32
    %c0_i32_0 = arith.constant 0 : i32
    return %arg0, %arg1, %c0_i32 : i32, i32, i32
  }
}

module attributes {stable_mosaic.version = 11 : i64} {
  func.func @_norm_kernel(%arg0: i32, %arg1: i32, %arg2: i32, %arg3: memref<1x4x256xf32, #tpu.memory_space<vmem>>, %arg4: memref<4x128xf32, #tpu.memory_space<vmem>>, %arg5: memref<4x128xf32, #tpu.memory_space<vmem>>, %arg6: memref<1x4x256xf32, #tpu.memory_space<vmem>>) attributes {dimension_semantics = [#tpu.dimension_semantics<parallel>, #tpu.dimension_semantics<parallel>, #tpu.dimension_semantics<parallel>], iteration_bounds = array<i64: 2, 1, 1>, scalar_prefetch = 0 : i64, scratch_operands = 0 : i64, tpu.core_type = #tpu.core_type<tc>, window_params = [{transform_indices = @transform_0, window_bounds = array<i64: 1, 4, 256>}, {transform_indices = @transform_1, window_bounds = array<i64: 4, 128>}, {transform_indices = @transform_2, window_bounds = array<i64: 4, 128>}, {transform_indices = @transform_3, window_bounds = array<i64: 1, 4, 256>}]} {
    %c0 = arith.constant 0 : index
    %c0_0 = arith.constant 0 : index
    %0 = vector.load %arg4[%c0, %c0_0] : memref<4x128xf32, #tpu.memory_space<vmem>>, vector<4x128xf32>
    %c0_1 = arith.constant 0 : index
    %c0_2 = arith.constant 0 : index
    %1 = vector.load %arg5[%c0_1, %c0_2] : memref<4x128xf32, #tpu.memory_space<vmem>>, vector<4x128xf32>
    %c0_3 = arith.constant 0 : index
    %c0_4 = arith.constant 0 : index
    %c0_5 = arith.constant 0 : index
    %2 = vector.load %arg3[%c0_3, %c0_4, %c0_5] : memref<1x4x256xf32, #tpu.memory_space<vmem>>, vector<1x4x128xf32>
    %3 = vector.shape_cast %2 : vector<1x4x128xf32> to vector<4x128xf32>
    %4 = arith.mulf %3, %0 : vector<4x128xf32>
    %5 = arith.addf %4, %1 : vector<4x128xf32>
    %c0_6 = arith.constant 0 : index
    %c0_7 = arith.constant 0 : index
    %c0_8 = arith.constant 0 : index
    %6 = vector.load %arg6[%c0_6, %c0_7, %c0_8] : memref<1x4x256xf32, #tpu.memory_space<vmem>>, vector<1x4x128xf32>
    %7 = vector.shape_cast %6 : vector<1x4x128xf32> to vector<4x128xf32>
    %8 = vector.shape_cast %5 : vector<4x128xf32> to vector<1x4x128xf32>
    tpu.vector_store %arg6[%c0_6, %c0_7, %c0_8], %8 {strides = array<i32>} : memref<1x4x256xf32, #tpu.memory_space<vmem>>, vector<1x4x128xf32>,
    %c0_9 = arith.constant 0 : index
    %c0_10 = arith.constant 0 : index
    %c128 = arith.constant 128 : index
    %9 = vector.load %arg3[%c0_9, %c0_10, %c128] : memref<1x4x256xf32, #tpu.memory_space<vmem>>, vector<1x4x128xf32>
    %10 = vector.shape_cast %9 : vector<1x4x128xf32> to vector<4x128xf32>
    %11 = arith.mulf %10, %0 : vector<4x128xf32>
    %12 = arith.addf %11, %1 : vector<4x128xf32>
    %c0_11 = arith.constant 0 : index
    %c0_12 = arith.constant 0 : index
    %c128_13 = arith.constant 128 : index
    %13 = vector.load %arg6[%c0_11, %c0_12, %c128_13] : memref<1x4x256xf32, #tpu.memory_space<vmem>>, vector<1x4x128xf32>
    %14 = vector.shape_cast %13 : vector<1x4x128xf32> to vector<4x128xf32>
    %15 = vector.shape_cast %12 : vector<4x128xf32> to vector<1x4x128xf32>
    tpu.vector_store %arg6[%c0_11, %c0_12, %c128_13], %15 {strides = array<i32>} : memref<1x4x256xf32, #tpu.memory_space<vmem>>, vector<1x4x128xf32>,
    return
  }
  func.func @transform_0(%arg0: i32, %arg1: i32, %arg2: i32) -> (i32, i32, i32) {
    %c0_i32 = arith.constant 0 : i32
    return %arg0, %arg1, %arg2 : i32, i32, i32
  }
  func.func @transform_1(%arg0: i32, %arg1: i32, %arg2: i32) -> (i32, i32) {
    %c0_i32 = arith.constant 0 : i32
    %c0_i32_0 = arith.constant 0 : i32
    return %arg1, %c0_i32 : i32, i32
  }
  func.func @transform_2(%arg0: i32, %arg1: i32, %arg2: i32) -> (i32, i32) {
    %c0_i32 = arith.constant 0 : i32
    %c0_i32_0 = arith.constant 0 : i32
    return %arg1, %c0_i32 : i32, i32
  }
  func.func @transform_3(%arg0: i32, %arg1: i32, %arg2: i32) -> (i32, i32, i32) {
    %c0_i32 = arith.constant 0 : i32
    return %arg0, %arg1, %arg2 : i32, i32, i32
  }
}

</mosaic_0001>

<llo_original>
// kernel: _dual_bn2d_impl.2
$region0: #{_dual_bn2d_impl.2}
  #allocation0 [shape = 'u32[]', space=smem, size = 0x4, offset = 0x4, fixed_abs, tag = 'smem constant byte address 0x4 - core index']
  #allocation1 [shape = 'u32[144,128]{1,0:T(1,128)}', space=vmem, size = 0x12000, scoped, tag = 'internal scratch']
  %s0 = inlined_call_operand.vmem [shape: f32[2,4,256], index: 0, kind: input, shape index: {}]
  %s1 = inlined_call_operand.vmem [shape: f32[2,4,128], index: 1, kind: output, shape index: {0}]
  %s2 = inlined_call_operand.vmem [shape: f32[2,4,128], index: 2, kind: output, shape index: {1}]
  %3 = xla_tuple %s1, %s2
  %s4 = sld [smem:[#allocation0]]
  $region49: #{_dual_bn2d_impl.2} parent=0
    _
  %s6 = ssub.s32 1, %s4
  %s7 = scalar_select 0, %s6, %s4
  loop: start=0, step=1, limit=4
  $region2: #{_dual_bn2d_impl.2} parent=0 // loop_pre_header
    _
  $region3: #{_dual_bn2d_impl.2} parent=0 // loop_header
    %s9 = sphi 0, %s13
    %p10 = scmp.ge.s32.totalorder %s9, 4
    %s16 = sphi 0, %s42
    %s17 = sphi 0, %s38
    %s18 = sphi 0, %s34
    %s19 = sphi 0, %s30
    %s20 = sphi 0, %s16
    %s21 = sphi 0, %s17
    %s22 = sphi 0, %s18
    %s23 = sphi 0, %s19
    %s24 = sphi 0, %s20
    %s25 = sphi 0, %s21
    %s26 = sphi 0, %s22
    %s27 = sphi 0, %s23
    %s51 = sphi 0, %s53
    %s54 = sphi 0, %s51
    %s55 = sphi 0, %s54
    %s71 = sphi 0, %s55
    %s79 = sphi 0, %s81
    %s82 = sphi 0, %s79
    %s83 = sphi 0, %s82
    %s99 = sphi 0, %s83
    %s107 = sphi 0, %s109
    %s110 = sphi 0, %s107
    %s111 = sphi 0, %s110
    %s127 = sphi 0, %s111
  $region4: #{_dual_bn2d_impl.2} parent=0 // loop_header_branch
    %12 = sbr.rel (%p10) target = $region8
  $region5: #{_dual_bn2d_impl.2} parent=0 // loop_body
    %s14 = ssub.s32 %s9, 1
    %s15 = ssub.s32 %s9, 2
    %s28 = sadd.s32 1, %s19
    %p29 = scmp.ge.s32.totalorder %s28, 1
    %s30 = scalar_select %p29, 0, %s28
    %s31 = sadd.s32 1, %s18
    %s32 = scalar_select %p29, %s31, %s18
    %p33 = scmp.ge.s32.totalorder %s32, 1
    %s34 = scalar_select %p33, 0, %s32
    %s35 = sadd.s32 1, %s17
    %s36 = scalar_select %p33, %s35, %s17
    %p37 = scmp.ge.s32.totalorder %s36, 1
    %s38 = scalar_select %p37, 0, %s36
    %s39 = sadd.s32 1, %s16
    %s40 = scalar_select %p37, %s39, %s16
    %p41 = scmp.ge.s32.totalorder %s40, 2
    %s42 = scalar_select %p41, 0, %s40
    %s43 = sadd.s32 %s16, %s18
    %s44 = sadd.s32 %s42, %s34
    %s45 = ssub.s32 %s43, %s44
    %s46 = ssub.s32 %s17, %s38
    %s47 = sor.u32 %s45, %s46
    %s48 = ssub.s32 %s19, %s30
    %s49 = sor.u32 %s47, %s48
    %p50 = scmp.eq.s32.totalorder %s49, 0
    %s52 = sadd.s32 %s51, 1
    %s53 = scalar_select %p50, %s51, %s52
    %p56 = pneg %p50
    %p57 = scmp.eq.s32.totalorder %s9, 1
    %p58 = por %p56, %p57
    %p59 = scmp.ne.s32.totalorder %s51, %s54
    %p60 = scmp.eq.s32.totalorder %s9, 0
    %p61 = por %p59, %p60
    %p62 = scmp.ne.s32.totalorder %s51, %s54
    %p63 = scmp.eq.s32.totalorder %s14, 1
    %p64 = por %p62, %p63
    %p65 = scmp.ne.s32.totalorder %s54, %s55
    %p66 = scmp.eq.s32.totalorder %s14, 0
    %p67 = por %p65, %p66
    %p68 = scmp.ne.s32.totalorder %s54, %s55
    %p69 = scmp.eq.s32.totalorder %s15, 1
    %p70 = por %p68, %p69
    %p72 = scmp.ne.s32.totalorder %s55, %s71
    %p73 = scmp.eq.s32.totalorder %s15, 0
    %p74 = por %p72, %p73
    %s75 = ssub.s32 %s16, %s42
    %s76 = ssub.s32 %s17, %s38
    %s77 = sor.u32 %s75, %s76
    %p78 = scmp.eq.s32.totalorder %s77, 0
    %s80 = sadd.s32 %s79, 1
    %s81 = scalar_select %p78, %s79, %s80
    %p84 = pneg %p78
    %p85 = scmp.eq.s32.totalorder %s9, 1
    %p86 = por %p84, %p85
    %p87 = scmp.ne.s32.totalorder %s79, %s82
    %p88 = scmp.eq.s32.totalorder %s9, 0
    %p89 = por %p87, %p88
    %p90 = scmp.ne.s32.totalorder %s79, %s82
    %p91 = scmp.eq.s32.totalorder %s14, 1
    %p92 = por %p90, %p91
    %p93 = scmp.ne.s32.totalorder %s82, %s83
    %p94 = scmp.eq.s32.totalorder %s14, 0
    %p95 = por %p93, %p94
    %p96 = scmp.ne.s32.totalorder %s82, %s83
    %p97 = scmp.eq.s32.totalorder %s15, 1
    %p98 = por %p96, %p97
    %p100 = scmp.ne.s32.totalorder %s83, %s99
    %p101 = scmp.eq.s32.totalorder %s15, 0
    %p102 = por %p100, %p101
    %s103 = ssub.s32 %s16, %s42
    %s104 = ssub.s32 %s17, %s38
    %s105 = sor.u32 %s103, %s104
    %p106 = scmp.eq.s32.totalorder %s105, 0
    %s108 = sadd.s32 %s107, 1
    %s109 = scalar_select %p106, %s107, %s108
    %p112 = pneg %p106
    %p113 = scmp.eq.s32.totalorder %s9, 1
    %p114 = por %p112, %p113
    %p115 = scmp.ne.s32.totalorder %s107, %s110
    %p116 = scmp.eq.s32.totalorder %s9, 0
    %p117 = por %p115, %p116
    %p118 = scmp.ne.s32.totalorder %s107, %s110
    %p119 = scmp.eq.s32.totalorder %s14, 1
    %p120 = por %p118, %p119
    %p121 = scmp.ne.s32.totalorder %s110, %s111
    %p122 = scmp.eq.s32.totalorder %s14, 0
    %p123 = por %p121, %p122
    %p124 = scmp.ne.s32.totalorder %s110, %s111
    %p125 = scmp.eq.s32.totalorder %s15, 1
    %p126 = por %p124, %p125
    %p128 = scmp.ne.s32.totalorder %s111, %s127
    %p129 = scmp.eq.s32.totalorder %s15, 0
    %p130 = por %p128, %p129
    %p131 = scmp.le.s32.totalorder 1, %s9
    %p132 = scmp.lt.s32.totalorder %s9, 3
    %p133 = pnand %p131, %p132
    %p134 = pneg %p133
    // Predicated region
    $region9: #{_dual_bn2d_impl.2} parent=5 // pred_check
      _
    $region10: #{_dual_bn2d_impl.2} parent=5 // pred_check_branch
      %136 = sbr.rel (%p133) target = $region12
    $region11: #{_dual_bn2d_impl.2} parent=5 // pred_region
      %s137 = ssub.s32 %s9, 1
    $region12: #{_dual_bn2d_impl.2} parent=5 // pred_fallthru
      _
    %p138 = scmp.lt.s32.totalorder %s9, 2
    // Predicated region
    $region13: #{_dual_bn2d_impl.2} parent=5 // pred_check
      %p139 = pneg %p138
    $region14: #{_dual_bn2d_impl.2} parent=5 // pred_check_branch
      %141 = sbr.rel (%p139) target = $region16
    $region15: #{_dual_bn2d_impl.2} parent=5 // pred_region
      // Predicated region
      $region17: #{_dual_bn2d_impl.2} parent=15 // pred_check
        %p142 = pneg %p61
      $region18: #{_dual_bn2d_impl.2} parent=15 // pred_check_branch
        %144 = sbr.rel (%p142) target = $region20
      $region19: #{_dual_bn2d_impl.2} parent=15 // pred_region
        %s145 = sadd.s32 %s16, %s18
        %s146 = smul.u32 2, %s19
        %p147 = scmp.lt.s32.totalorder %s145, 1
        %s148 = scalar_select %p147, %s145, 1
        %p149 = scmp.lt.s32.totalorder %s17, 0
        %s150 = scalar_select %p149, %s17, 0
        %p151 = scmp.lt.s32.totalorder %s146, 1
        %s152 = scalar_select %p151, %s146, 1
        %s153 = smul.addr %s150, 2
        %s154 = sadd.s32 %s152, %s153
        %s155 = smul.addr %s148, 2
        %s156 = sadd.s32 %s154, %s155
        %s157 = smul.addr %s156, 4
        %s158 = scalar_lea.vmem %s0, %s157
        %s159 = sadd.s32 %s16, %s18
        %s160 = smul.u32 2, %s19
      $region20: #{_dual_bn2d_impl.2} parent=15 // pred_fallthru
        _
    $region16: #{_dual_bn2d_impl.2} parent=5 // pred_fallthru
      _
    %p161 = scmp.le.s32.totalorder 1, %s9
    %p162 = scmp.lt.s32.totalorder %s9, 3
    %p163 = pnand %p161, %p162
    %p164 = pneg %p163
    // Predicated region
    $region21: #{_dual_bn2d_impl.2} parent=5 // pred_check
      _
    $region22: #{_dual_bn2d_impl.2} parent=5 // pred_check_branch
      %166 = sbr.rel (%p163) target = $region24
    $region23: #{_dual_bn2d_impl.2} parent=5 // pred_region
      %s167 = ssub.s32 %s9, 1
      %s168 = sadd.s32 %s20, %s22
      %s169 = smul.u32 2, %s23
      %p170 = scmp.lt.s32.totalorder %s168, 1
      %s171 = scalar_select %p170, %s168, 1
      %p172 = scmp.lt.s32.totalorder %s21, 0
      %s173 = scalar_select %p172, %s21, 0
      %p174 = scmp.lt.s32.totalorder %s169, 1
      %s175 = scalar_select %p174, %s169, 1
      %s176 = smul.addr %s173, 2
      %s177 = sadd.s32 %s175, %s176
      %s178 = smul.addr %s171, 2
      %s179 = sadd.s32 %s177, %s178
      %s180 = smul.addr %s179, 4
      %s181 = scalar_lea.vmem %s0, %s180
      %p182 = pneg %p67
      %p183 = pneg %p64
      %p184 = pneg %p95
      %p185 = pneg %p92
      %p186 = scmp.lt.s32.totalorder %s20, 1
      %s187 = scalar_select %p186, %s20, 1
      %p188 = scmp.lt.s32.totalorder %s21, 0
      %s189 = scalar_select %p188, %s21, 0
      %s190 = sadd.s32 %s189, %s187
      %s191 = smul.addr %s190, 4
      %s192 = scalar_lea.vmem %s1, %s191
      %p193 = pneg %p123
      %p194 = pneg %p120
      %p195 = scmp.lt.s32.totalorder %s20, 1
      %s196 = scalar_select %p195, %s20, 1
      %p197 = scmp.lt.s32.totalorder %s21, 0
      %s198 = scalar_select %p197, %s21, 0
      %s199 = sadd.s32 %s198, %s196
      %s200 = smul.addr %s199, 4
      %s201 = scalar_lea.vmem %s2, %s200
      %s202 = sadd.s32 %s20, %s22
      %s203 = smul.u32 2, %s23
      %p204 = scmp.lt.s32.totalorder %s202, 1
      %s205 = scalar_select %p204, %s202, 1
      %p206 = scmp.lt.s32.totalorder %s21, 0
      %s207 = scalar_select %p206, %s21, 0
      %p208 = scmp.lt.s32.totalorder %s203, 1
      %s209 = scalar_select %p208, %s203, 1
      %s210 = smul.addr %s207, 2
      %s211 = sadd.s32 %s209, %s210
      %s212 = smul.addr %s205, 2
      %s213 = sadd.s32 %s211, %s212
      %s214 = smul.addr %s213, 4
      %s215 = scalar_lea.vmem %s0, %s214
      %s216 = sadd.s32 %s20, %s22
      %s217 = smul.u32 2, %s23
      %p218 = scmp.lt.s32.totalorder %s20, 1
      %s219 = scalar_select %p218, %s20, 1
      %p220 = scmp.lt.s32.totalorder %s21, 0
      %s221 = scalar_select %p220, %s21, 0
      %s222 = sadd.s32 %s221, %s219
      %s223 = smul.addr %s222, 4
      %s224 = scalar_lea.vmem %s1, %s223
      %p225 = scmp.lt.s32.totalorder %s20, 1
      %s226 = scalar_select %p225, %s20, 1
      %p227 = scmp.lt.s32.totalorder %s21, 0
      %s228 = scalar_select %p227, %s21, 0
      %s229 = sadd.s32 %s228, %s226
      %s230 = smul.addr %s229, 4
      %s231 = scalar_lea.vmem %s2, %s230
      %p232 = scmp.eq.s32.totalorder %s22, 0
      %p233 = scmp.eq.s32.totalorder %s23, 0
      %p234 = pnand %p232, %p233
      %p235 = pneg %p234
      // Predicated region
      $region25: #{_dual_bn2d_impl.2} parent=23 // pred_check
        _
      $region26: #{_dual_bn2d_impl.2} parent=23 // pred_check_branch
        %237 = sbr.rel (%p234) target = $region28
      $region27: #{_dual_bn2d_impl.2} parent=23 // pred_region
        %238 = vst [vmem:[%s224] sm:$0xf] 0.0
        %239 = vst [vmem:[%s231] sm:$0xf] 0.0
      $region28: #{_dual_bn2d_impl.2} parent=23 // pred_fallthru
        _
      %v240 = vld [vmem:[%s224] sm:$0xf]
      %v241 = vld [vmem:[%s231] sm:$0xf]
      %v242 = vld [vmem:[%s215] sm:$0xf]
      %v243 = vadd.f32 %v240, %v242
      %v244 = vmul.f32 %v242, %v242
      %v245 = vadd.f32 %v241, %v244
      %v246 = vld [vmem:[%s215 + $0x4] sm:$0xf]
      %v247 = vadd.f32 %v243, %v246
      %v248 = vmul.f32 %v246, %v246
      %v249 = vadd.f32 %v245, %v248
      %250 = vst [vmem:[%s224] sm:$0xf] %v247
      %251 = vst [vmem:[%s231] sm:$0xf] %v249
      %p252 = scmp.lt.s32.totalorder %s20, 1
      %s253 = scalar_select %p252, %s20, 1
      %p254 = scmp.lt.s32.totalorder %s21, 0
      %s255 = scalar_select %p254, %s21, 0
      %s256 = sadd.s32 %s255, %s253
      %s257 = smul.addr %s256, 4
      %s258 = scalar_lea.vmem %s1, %s257
      %p259 = scmp.lt.s32.totalorder %s20, 1
      %s260 = scalar_select %p259, %s20, 1
      %p261 = scmp.lt.s32.totalorder %s21, 0
      %s262 = scalar_select %p261, %s21, 0
      %s263 = sadd.s32 %s262, %s260
      %s264 = smul.addr %s263, 4
      %s265 = scalar_lea.vmem %s2, %s264
      // Predicated region
      $region29: #{_dual_bn2d_impl.2} parent=23 // pred_check
        %p266 = pneg %p92
      $region30: #{_dual_bn2d_impl.2} parent=23 // pred_check_branch
        %268 = sbr.rel (%p266) target = $region32
      $region31: #{_dual_bn2d_impl.2} parent=23 // pred_region
        _
      $region32: #{_dual_bn2d_impl.2} parent=23 // pred_fallthru
        _
      // Predicated region
      $region33: #{_dual_bn2d_impl.2} parent=23 // pred_check
        %p269 = pneg %p120
      $region34: #{_dual_bn2d_impl.2} parent=23 // pred_check_branch
        %271 = sbr.rel (%p269) target = $region36
      $region35: #{_dual_bn2d_impl.2} parent=23 // pred_region
        _
      $region36: #{_dual_bn2d_impl.2} parent=23 // pred_fallthru
        _
    $region24: #{_dual_bn2d_impl.2} parent=5 // pred_fallthru
      _
    %p272 = scmp.le.s32.totalorder 2, %s9
    // Predicated region
    $region37: #{_dual_bn2d_impl.2} parent=5 // pred_check
      %p273 = pneg %p272
    $region38: #{_dual_bn2d_impl.2} parent=5 // pred_check_branch
      %275 = sbr.rel (%p273) target = $region40
    $region39: #{_dual_bn2d_impl.2} parent=5 // pred_region
      %s276 = ssub.s32 %s9, 2
      // Predicated region
      $region41: #{_dual_bn2d_impl.2} parent=39 // pred_check
        %p277 = pneg %p98
      $region42: #{_dual_bn2d_impl.2} parent=39 // pred_check_branch
        %279 = sbr.rel (%p277) target = $region44
      $region43: #{_dual_bn2d_impl.2} parent=39 // pred_region
        %p280 = scmp.lt.s32.totalorder %s24, 1
        %s281 = scalar_select %p280, %s24, 1
        %p282 = scmp.lt.s32.totalorder %s25, 0
        %s283 = scalar_select %p282, %s25, 0
        %s284 = sadd.s32 %s283, %s281
        %s285 = smul.addr %s284, 4
        %s286 = scalar_lea.vmem %s1, %s285
      $region44: #{_dual_bn2d_impl.2} parent=39 // pred_fallthru
        _
      // Predicated region
      $region45: #{_dual_bn2d_impl.2} parent=39 // pred_check
        %p287 = pneg %p126
      $region46: #{_dual_bn2d_impl.2} parent=39 // pred_check_branch
        %289 = sbr.rel (%p287) target = $region48
      $region47: #{_dual_bn2d_impl.2} parent=39 // pred_region
        %p290 = scmp.lt.s32.totalorder %s24, 1
        %s291 = scalar_select %p290, %s24, 1
        %p292 = scmp.lt.s32.totalorder %s25, 0
        %s293 = scalar_select %p292, %s25, 0
        %s294 = sadd.s32 %s293, %s291
        %s295 = smul.addr %s294, 4
        %s296 = scalar_lea.vmem %s2, %s295
      $region48: #{_dual_bn2d_impl.2} parent=39 // pred_fallthru
        _
    $region40: #{_dual_bn2d_impl.2} parent=5 // pred_fallthru
      _
  $region6: #{_dual_bn2d_impl.2} parent=0 // loop_footer
    %s13 = sadd.s32 1, %s9
  $region7: #{_dual_bn2d_impl.2} parent=0 // loop_footer_branch
    %8 = sbr.rel target = $region3
  $region8: #{_dual_bn2d_impl.2} parent=0 // loop_exit
    _

// kernel: _dual_bn2d_impl.3
$region0: #{_dual_bn2d_impl.3}
  #allocation0 [shape = 'u32[]', space=smem, size = 0x4, offset = 0x4, fixed_abs, tag = 'smem constant byte address 0x4 - core index']
  #allocation1 [shape = 'u32[144,128]{1,0:T(1,128)}', space=vmem, size = 0x12000, scoped, tag = 'internal scratch']
  %s0 = inlined_call_operand.vmem [shape: f32[2,4,256], index: 0, kind: input, shape index: {}]
  %s1 = inlined_call_operand.vmem [shape: f32[4,128], index: 1, kind: input, shape index: {}]
  %s2 = inlined_call_operand.vmem [shape: f32[4,128], index: 2, kind: input, shape index: {}]
  %s3 = inlined_call_operand.vmem [shape: f32[2,4,256], index: 3, kind: output, shape index: {}]
  %s4 = sld [smem:[#allocation0]]
  $region45: #{_dual_bn2d_impl.3} parent=0
    _
  %s6 = ssub.s32 1, %s4
  %s7 = scalar_select 0, %s6, %s4
  loop: start=0, step=1, limit=4
  $region2: #{_dual_bn2d_impl.3} parent=0 // loop_pre_header
    _
  $region3: #{_dual_bn2d_impl.3} parent=0 // loop_header
    %s9 = sphi 0, %s13
    %p10 = scmp.ge.s32.totalorder %s9, 4
    %s16 = sphi 0, %s35
    %s17 = sphi 0, %s31
    %s18 = sphi 0, %s27
    %s19 = sphi 0, %s16
    %s20 = sphi 0, %s17
    %s21 = sphi 0, %s18
    %s22 = sphi 0, %s19
    %s23 = sphi 0, %s20
    %s24 = sphi 0, %s21
    %s42 = sphi 0, %s44
    %s45 = sphi 0, %s42
    %s46 = sphi 0, %s45
    %s62 = sphi 0, %s46
    %s68 = sphi 0, %s70
    %s71 = sphi 0, %s68
    %s72 = sphi 0, %s71
    %s88 = sphi 0, %s72
    %s94 = sphi 0, %s96
    %s97 = sphi 0, %s94
    %s98 = sphi 0, %s97
    %s114 = sphi 0, %s98
    %s124 = sphi 0, %s126
    %s127 = sphi 0, %s124
    %s128 = sphi 0, %s127
    %s144 = sphi 0, %s128
  $region4: #{_dual_bn2d_impl.3} parent=0 // loop_header_branch
    %12 = sbr.rel (%p10) target = $region8
  $region5: #{_dual_bn2d_impl.3} parent=0 // loop_body
    %s14 = ssub.s32 %s9, 1
    %s15 = ssub.s32 %s9, 2
    %s25 = sadd.s32 1, %s18
    %p26 = scmp.ge.s32.totalorder %s25, 1
    %s27 = scalar_select %p26, 0, %s25
    %s28 = sadd.s32 1, %s17
    %s29 = scalar_select %p26, %s28, %s17
    %p30 = scmp.ge.s32.totalorder %s29, 1
    %s31 = scalar_select %p30, 0, %s29
    %s32 = sadd.s32 1, %s16
    %s33 = scalar_select %p30, %s32, %s16
    %p34 = scmp.ge.s32.totalorder %s33, 2
    %s35 = scalar_select %p34, 0, %s33
    %s36 = ssub.s32 %s16, %s35
    %s37 = ssub.s32 %s17, %s31
    %s38 = sor.u32 %s36, %s37
    %s39 = ssub.s32 %s18, %s27
    %s40 = sor.u32 %s38, %s39
    %p41 = scmp.eq.s32.totalorder %s40, 0
    %s43 = sadd.s32 %s42, 1
    %s44 = scalar_select %p41, %s42, %s43
    %p47 = pneg %p41
    %p48 = scmp.eq.s32.totalorder %s9, 1
    %p49 = por %p47, %p48
    %p50 = scmp.ne.s32.totalorder %s42, %s45
    %p51 = scmp.eq.s32.totalorder %s9, 0
    %p52 = por %p50, %p51
    %p53 = scmp.ne.s32.totalorder %s42, %s45
    %p54 = scmp.eq.s32.totalorder %s14, 1
    %p55 = por %p53, %p54
    %p56 = scmp.ne.s32.totalorder %s45, %s46
    %p57 = scmp.eq.s32.totalorder %s14, 0
    %p58 = por %p56, %p57
    %p59 = scmp.ne.s32.totalorder %s45, %s46
    %p60 = scmp.eq.s32.totalorder %s15, 1
    %p61 = por %p59, %p60
    %p63 = scmp.ne.s32.totalorder %s46, %s62
    %p64 = scmp.eq.s32.totalorder %s15, 0
    %p65 = por %p63, %p64
    %s66 = ssub.s32 %s17, %s31
    %p67 = scmp.eq.s32.totalorder %s66, 0
    %s69 = sadd.s32 %s68, 1
    %s70 = scalar_select %p67, %s68, %s69
    %p73 = pneg %p67
    %p74 = scmp.eq.s32.totalorder %s9, 1
    %p75 = por %p73, %p74
    %p76 = scmp.ne.s32.totalorder %s68, %s71
    %p77 = scmp.eq.s32.totalorder %s9, 0
    %p78 = por %p76, %p77
    %p79 = scmp.ne.s32.totalorder %s68, %s71
    %p80 = scmp.eq.s32.totalorder %s14, 1
    %p81 = por %p79, %p80
    %p82 = scmp.ne.s32.totalorder %s71, %s72
    %p83 = scmp.eq.s32.totalorder %s14, 0
    %p84 = por %p82, %p83
    %p85 = scmp.ne.s32.totalorder %s71, %s72
    %p86 = scmp.eq.s32.totalorder %s15, 1
    %p87 = por %p85, %p86
    %p89 = scmp.ne.s32.totalorder %s72, %s88
    %p90 = scmp.eq.s32.totalorder %s15, 0
    %p91 = por %p89, %p90
    %s92 = ssub.s32 %s17, %s31
    %p93 = scmp.eq.s32.totalorder %s92, 0
    %s95 = sadd.s32 %s94, 1
    %s96 = scalar_select %p93, %s94, %s95
    %p99 = pneg %p93
    %p100 = scmp.eq.s32.totalorder %s9, 1
    %p101 = por %p99, %p100
    %p102 = scmp.ne.s32.totalorder %s94, %s97
    %p103 = scmp.eq.s32.totalorder %s9, 0
    %p104 = por %p102, %p103
    %p105 = scmp.ne.s32.totalorder %s94, %s97
    %p106 = scmp.eq.s32.totalorder %s14, 1
    %p107 = por %p105, %p106
    %p108 = scmp.ne.s32.totalorder %s97, %s98
    %p109 = scmp.eq.s32.totalorder %s14, 0
    %p110 = por %p108, %p109
    %p111 = scmp.ne.s32.totalorder %s97, %s98
    %p112 = scmp.eq.s32.totalorder %s15, 1
    %p113 = por %p111, %p112
    %p115 = scmp.ne.s32.totalorder %s98, %s114
    %p116 = scmp.eq.s32.totalorder %s15, 0
    %p117 = por %p115, %p116
    %s118 = ssub.s32 %s16, %s35
    %s119 = ssub.s32 %s17, %s31
    %s120 = sor.u32 %s118, %s119
    %s121 = ssub.s32 %s18, %s27
    %s122 = sor.u32 %s120, %s121
    %p123 = scmp.eq.s32.totalorder %s122, 0
    %s125 = sadd.s32 %s124, 1
    %s126 = scalar_select %p123, %s124, %s125
    %p129 = pneg %p123
    %p130 = scmp.eq.s32.totalorder %s9, 1
    %p131 = por %p129, %p130
    %p132 = scmp.ne.s32.totalorder %s124, %s127
    %p133 = scmp.eq.s32.totalorder %s9, 0
    %p134 = por %p132, %p133
    %p135 = scmp.ne.s32.totalorder %s124, %s127
    %p136 = scmp.eq.s32.totalorder %s14, 1
    %p137 = por %p135, %p136
    %p138 = scmp.ne.s32.totalorder %s127, %s128
    %p139 = scmp.eq.s32.totalorder %s14, 0
    %p140 = por %p138, %p139
    %p141 = scmp.ne.s32.totalorder %s127, %s128
    %p142 = scmp.eq.s32.totalorder %s15, 1
    %p143 = por %p141, %p142
    %p145 = scmp.ne.s32.totalorder %s128, %s144
    %p146 = scmp.eq.s32.totalorder %s15, 0
    %p147 = por %p145, %p146
    %p148 = scmp.le.s32.totalorder 1, %s9
    %p149 = scmp.lt.s32.totalorder %s9, 3
    %p150 = pnand %p148, %p149
    %p151 = pneg %p150
    // Predicated region
    $region9: #{_dual_bn2d_impl.3} parent=5 // pred_check
      _
    $region10: #{_dual_bn2d_impl.3} parent=5 // pred_check_branch
      %153 = sbr.rel (%p150) target = $region12
    $region11: #{_dual_bn2d_impl.3} parent=5 // pred_region
      %s154 = ssub.s32 %s9, 1
      // Predicated region
      $region13: #{_dual_bn2d_impl.3} parent=11 // pred_check
        %p155 = pneg %p84
      $region14: #{_dual_bn2d_impl.3} parent=11 // pred_check_branch
        %157 = sbr.rel (%p155) target = $region16
      $region15: #{_dual_bn2d_impl.3} parent=11 // pred_region
        %p158 = scmp.lt.s32.totalorder %s20, 0
        %s159 = scalar_select %p158, %s20, 0
        %s160 = smul.addr %s159, 4
        %s161 = scalar_lea.vmem %s1, %s160
      $region16: #{_dual_bn2d_impl.3} parent=11 // pred_fallthru
        _
      // Predicated region
      $region17: #{_dual_bn2d_impl.3} parent=11 // pred_check
        %p162 = pneg %p110
      $region18: #{_dual_bn2d_impl.3} parent=11 // pred_check_branch
        %164 = sbr.rel (%p162) target = $region20
      $region19: #{_dual_bn2d_impl.3} parent=11 // pred_region
        %p165 = scmp.lt.s32.totalorder %s20, 0
        %s166 = scalar_select %p165, %s20, 0
        %s167 = smul.addr %s166, 4
        %s168 = scalar_lea.vmem %s2, %s167
      $region20: #{_dual_bn2d_impl.3} parent=11 // pred_fallthru
        _
    $region12: #{_dual_bn2d_impl.3} parent=5 // pred_fallthru
      _
    %p169 = scmp.lt.s32.totalorder %s9, 2
    // Predicated region
    $region21: #{_dual_bn2d_impl.3} parent=5 // pred_check
      %p170 = pneg %p169
    $region22: #{_dual_bn2d_impl.3} parent=5 // pred_check_branch
      %172 = sbr.rel (%p170) target = $region24
    $region23: #{_dual_bn2d_impl.3} parent=5 // pred_region
      // Predicated region
      $region25: #{_dual_bn2d_impl.3} parent=23 // pred_check
        %p173 = pneg %p52
      $region26: #{_dual_bn2d_impl.3} parent=23 // pred_check_branch
        %175 = sbr.rel (%p173) target = $region28
      $region27: #{_dual_bn2d_impl.3} parent=23 // pred_region
        %s176 = smul.u32 2, %s18
        %p177 = scmp.lt.s32.totalorder %s16, 1
        %s178 = scalar_select %p177, %s16, 1
        %p179 = scmp.lt.s32.totalorder %s17, 0
        %s180 = scalar_select %p179, %s17, 0
        %p181 = scmp.lt.s32.totalorder %s176, 1
        %s182 = scalar_select %p181, %s176, 1
        %s183 = smul.addr %s180, 2
        %s184 = sadd.s32 %s182, %s183
        %s185 = smul.addr %s178, 2
        %s186 = sadd.s32 %s184, %s185
        %s187 = smul.addr %s186, 4
        %s188 = scalar_lea.vmem %s0, %s187
        %s189 = smul.u32 2, %s18
      $region28: #{_dual_bn2d_impl.3} parent=23 // pred_fallthru
        _
    $region24: #{_dual_bn2d_impl.3} parent=5 // pred_fallthru
      _
    %p190 = scmp.le.s32.totalorder 1, %s9
    %p191 = scmp.lt.s32.totalorder %s9, 3
    %p192 = pnand %p190, %p191
    %p193 = pneg %p192
    // Predicated region
    $region29: #{_dual_bn2d_impl.3} parent=5 // pred_check
      _
    $region30: #{_dual_bn2d_impl.3} parent=5 // pred_check_branch
      %195 = sbr.rel (%p192) target = $region32
    $region31: #{_dual_bn2d_impl.3} parent=5 // pred_region
      %s196 = ssub.s32 %s9, 1
      %s197 = smul.u32 2, %s21
      %p198 = scmp.lt.s32.totalorder %s19, 1
      %s199 = scalar_select %p198, %s19, 1
      %p200 = scmp.lt.s32.totalorder %s20, 0
      %s201 = scalar_select %p200, %s20, 0
      %p202 = scmp.lt.s32.totalorder %s197, 1
      %s203 = scalar_select %p202, %s197, 1
      %s204 = smul.addr %s201, 2
      %s205 = sadd.s32 %s203, %s204
      %s206 = smul.addr %s199, 2
      %s207 = sadd.s32 %s205, %s206
      %s208 = smul.addr %s207, 4
      %s209 = scalar_lea.vmem %s0, %s208
      %p210 = pneg %p58
      %p211 = pneg %p55
      %p212 = scmp.lt.s32.totalorder %s20, 0
      %s213 = scalar_select %p212, %s20, 0
      %s214 = smul.addr %s213, 4
      %s215 = scalar_lea.vmem %s1, %s214
      %p216 = pneg %p84
      %p217 = pneg %p81
      %p218 = scmp.lt.s32.totalorder %s20, 0
      %s219 = scalar_select %p218, %s20, 0
      %s220 = smul.addr %s219, 4
      %s221 = scalar_lea.vmem %s2, %s220
      %p222 = pneg %p110
      %p223 = pneg %p107
      %p224 = pneg %p140
      %p225 = pneg %p137
      %s226 = smul.u32 2, %s21
      %p227 = scmp.lt.s32.totalorder %s19, 1
      %s228 = scalar_select %p227, %s19, 1
      %p229 = scmp.lt.s32.totalorder %s20, 0
      %s230 = scalar_select %p229, %s20, 0
      %p231 = scmp.lt.s32.totalorder %s226, 1
      %s232 = scalar_select %p231, %s226, 1
      %s233 = smul.addr %s230, 2
      %s234 = sadd.s32 %s232, %s233
      %s235 = smul.addr %s228, 2
      %s236 = sadd.s32 %s234, %s235
      %s237 = smul.addr %s236, 4
      %s238 = scalar_lea.vmem %s3, %s237
      %s239 = smul.u32 2, %s21
      %p240 = scmp.lt.s32.totalorder %s19, 1
      %s241 = scalar_select %p240, %s19, 1
      %p242 = scmp.lt.s32.totalorder %s20, 0
      %s243 = scalar_select %p242, %s20, 0
      %p244 = scmp.lt.s32.totalorder %s239, 1
      %s245 = scalar_select %p244, %s239, 1
      %s246 = smul.addr %s243, 2
      %s247 = sadd.s32 %s245, %s246
      %s248 = smul.addr %s241, 2
      %s249 = sadd.s32 %s247, %s248
      %s250 = smul.addr %s249, 4
      %s251 = scalar_lea.vmem %s0, %s250
      %s252 = smul.u32 2, %s21
      %p253 = scmp.lt.s32.totalorder %s20, 0
      %s254 = scalar_select %p253, %s20, 0
      %s255 = smul.addr %s254, 4
      %s256 = scalar_lea.vmem %s1, %s255
      %p257 = scmp.lt.s32.totalorder %s20, 0
      %s258 = scalar_select %p257, %s20, 0
      %s259 = smul.addr %s258, 4
      %s260 = scalar_lea.vmem %s2, %s259
      %s261 = smul.u32 2, %s21
      %p262 = scmp.lt.s32.totalorder %s19, 1
      %s263 = scalar_select %p262, %s19, 1
      %p264 = scmp.lt.s32.totalorder %s20, 0
      %s265 = scalar_select %p264, %s20, 0
      %p266 = scmp.lt.s32.totalorder %s261, 1
      %s267 = scalar_select %p266, %s261, 1
      %s268 = smul.addr %s265, 2
      %s269 = sadd.s32 %s267, %s268
      %s270 = smul.addr %s263, 2
      %s271 = sadd.s32 %s269, %s270
      %s272 = smul.addr %s271, 4
      %s273 = scalar_lea.vmem %s3, %s272
      %s274 = smul.u32 2, %s21
      %v275 = vld [vmem:[%s256] sm:$0xf]
      %v276 = vld [vmem:[%s260] sm:$0xf]
      %v277 = vld [vmem:[%s251] sm:$0xf]
      %v278 = vmul.f32 %v277, %v275
      %v279 = vadd.f32 %v278, %v276
      %280 = vst [vmem:[%s273] sm:$0xf] %v279
      %v281 = vld [vmem:[%s251 + $0x4] sm:$0xf]
      %v282 = vmul.f32 %v281, %v275
      %v283 = vadd.f32 %v282, %v276
      %284 = vst [vmem:[%s273 + $0x4] sm:$0xf] %v283
      %s285 = smul.u32 2, %s21
      %p286 = scmp.lt.s32.totalorder %s19, 1
      %s287 = scalar_select %p286, %s19, 1
      %p288 = scmp.lt.s32.totalorder %s20, 0
      %s289 = scalar_select %p288, %s20, 0
      %p290 = scmp.lt.s32.totalorder %s285, 1
      %s291 = scalar_select %p290, %s285, 1
      %s292 = smul.addr %s289, 2
      %s293 = sadd.s32 %s291, %s292
      %s294 = smul.addr %s287, 2
      %s295 = sadd.s32 %s293, %s294
      %s296 = smul.addr %s295, 4
      %s297 = scalar_lea.vmem %s3, %s296
      // Predicated region
      $region33: #{_dual_bn2d_impl.3} parent=31 // pred_check
        %p298 = pneg %p137
      $region34: #{_dual_bn2d_impl.3} parent=31 // pred_check_branch
        %300 = sbr.rel (%p298) target = $region36
      $region35: #{_dual_bn2d_impl.3} parent=31 // pred_region
        %s301 = smul.u32 2, %s21
      $region36: #{_dual_bn2d_impl.3} parent=31 // pred_fallthru
        _
    $region32: #{_dual_bn2d_impl.3} parent=5 // pred_fallthru
      _
    %p302 = scmp.le.s32.totalorder 2, %s9
    // Predicated region
    $region37: #{_dual_bn2d_impl.3} parent=5 // pred_check
      %p303 = pneg %p302
    $region38: #{_dual_bn2d_impl.3} parent=5 // pred_check_branch
      %305 = sbr.rel (%p303) target = $region40
    $region39: #{_dual_bn2d_impl.3} parent=5 // pred_region
      %s306 = ssub.s32 %s9, 2
      // Predicated region
      $region41: #{_dual_bn2d_impl.3} parent=39 // pred_check
        %p307 = pneg %p143
      $region42: #{_dual_bn2d_impl.3} parent=39 // pred_check_branch
        %309 = sbr.rel (%p307) target = $region44
      $region43: #{_dual_bn2d_impl.3} parent=39 // pred_region
        %s310 = smul.u32 2, %s24
        %p311 = scmp.lt.s32.totalorder %s22, 1
        %s312 = scalar_select %p311, %s22, 1
        %p313 = scmp.lt.s32.totalorder %s23, 0
        %s314 = scalar_select %p313, %s23, 0
        %p315 = scmp.lt.s32.totalorder %s310, 1
        %s316 = scalar_select %p315, %s310, 1
        %s317 = smul.addr %s314, 2
        %s318 = sadd.s32 %s316, %s317
        %s319 = smul.addr %s312, 2
        %s320 = sadd.s32 %s318, %s319
        %s321 = smul.addr %s320, 4
        %s322 = scalar_lea.vmem %s3, %s321
      $region44: #{_dual_bn2d_impl.3} parent=39 // pred_fallthru
        _
    $region40: #{_dual_bn2d_impl.3} parent=5 // pred_fallthru
      _
  $region6: #{_dual_bn2d_impl.3} parent=0 // loop_footer
    %s13 = sadd.s32 1, %s9
  $region7: #{_dual_bn2d_impl.3} parent=0 // loop_footer_branch
    %8 = sbr.rel target = $region3
  $region8: #{_dual_bn2d_impl.3} parent=0 // loop_exit
    _

</llo_original>
